<compile_context>
chip_gen: v7x
topology: tpu7x:2x2x1
jax: 0.10.0
libtpu: 0.0.40
codegen_flags: <defaults>
</compile_context>

<pallas_src>
import jax
import jax.numpy as jnp
from jax.experimental import pallas as pl
from jax.experimental.pallas import tpu as pltpu


def _round_up(x, m):
    return ((x + m - 1) // m) * m


# ---------------------------------------------------------------------------
# Pallas kernel: fused (table-folded) gather + MLP + LayerNorm, [feature, token]
# ---------------------------------------------------------------------------
def _text_encoder_kernel(ids_ref, w1t_ref, b1_ref, w2_ref, b2_ref,
                         gamma_ref, beta_ref, o_ref):
    VS = w1t_ref.shape[1]            # vocab + max_positions
    E = o_ref.shape[0]               # embedding dim (sublane axis)
    T = ids_ref.shape[1]             # tokens in this tile (lane axis)

    ids = ids_ref[...]               # [2, T] int32
    tok = ids[0:1, :]                # [1, T] token ids          (< V)
    pos = ids[1:2, :]                # [1, T] V + position ids   (>= V)

    # Two-hot gather mask; tok and pos rows are disjoint so OR == add.
    rows = jax.lax.broadcasted_iota(jnp.int32, (VS, T), 0)
    twohot = ((rows == tok) | (rows == pos)).astype(jnp.bfloat16)       # [VS, T]

    # Table already folded into W1: one bf16 MXU matmul does gather + pos-add
    # + first linear layer, accumulating in f32.
    h = jnp.dot(w1t_ref[...], twohot,
                preferred_element_type=jnp.float32) + b1_ref[...]       # [H, T]

    # SWISH / SiLU in f32 (EUP), single cast to bf16 feeding the W2 matmul.
    act = (h * jax.nn.sigmoid(h)).astype(jnp.bfloat16)                  # [H, T]
    y = jnp.dot(w2_ref[...], act,
                preferred_element_type=jnp.float32) + b2_ref[...]       # [E, T]

    # One-pass LayerNorm over the embedding axis (sublane reduce), f32.
    inv_e = 1.0 / E
    mean = jnp.sum(y, axis=0, keepdims=True) * inv_e                    # [1, T]
    meansq = jnp.sum(y * y, axis=0, keepdims=True) * inv_e              # [1, T]
    var = meansq - mean * mean
    y_norm = (y - mean) * jax.lax.rsqrt(var + 1e-5)
    o_ref[...] = y_norm * gamma_ref[...] + beta_ref[...]                # [E, T]


def _vmem_limit_bytes(tile_m, E, H, VS):
    # Honest per-tile footprint with a 2x safety margin (no 16-32 MiB floor).
    io = 2 * (2 * tile_m * 4 + E * tile_m * 4)                # ids + out, double-buffered
    weights = 2 * ((H * VS + E * H) * 2 + (H + 3 * E) * 4)    # resident bf16 weights + f32 vecs
    interm = tile_m * (VS * (4 + 2)        # iota (i32) + twohot (bf16)
                       + H * (4 + 2)       # h (f32) + act (bf16)
                       + E * 4             # y (f32)
                       + 4 * 4)            # mean / meansq / var / rsqrt rows
    est = io + weights + interm
    return int(min(48 * 1024 * 1024, max(2 * est, 8 * 1024 * 1024)))


def _run_text_encoder(ids2, w1_table, b1, w2_T, b2, gamma, beta, tile_m):
    """ids2: [2, M_pad] int32 -> output [E, M_pad] float32 (transposed, lane-dense)."""
    H, VS = w1_table.shape
    E = w2_T.shape[0]
    M_pad = ids2.shape[1]
    num_tiles = M_pad // tile_m

    def resident(shape):
        return pl.BlockSpec(shape, lambda i: (0, 0))   # stays in VMEM across tiles

    grid_spec = pltpu.PrefetchScalarGridSpec(
        num_scalar_prefetch=0,
        grid=(num_tiles,),
        in_specs=[
            pl.BlockSpec((2, tile_m), lambda i: (0, i)),   # token / position ids
            resident((H, VS)),                             # W1ᵀ folded with embedding table (bf16)
            resident((H, 1)),                              # b1
            resident((E, H)),                              # W2ᵀ (bf16)
            resident((E, 1)),                              # b2
            resident((E, 1)),                              # gamma
            resident((E, 1)),                              # beta
        ],
        out_specs=pl.BlockSpec((E, tile_m), lambda i: (0, i)),
    )

    flops = 2 * M_pad * H * VS + 2 * M_pad * E * H           # folded-gather matmul + W2 matmul
    transcendentals = M_pad * H                              # sigmoid
    bytes_accessed = (2 * M_pad * 4 + E * M_pad * 4
                      + (H * VS + E * H) * 2 + (H + 3 * E) * 4)

    return pl.pallas_call(
        _text_encoder_kernel,
        out_shape=jax.ShapeDtypeStruct((E, M_pad), jnp.float32),
        grid_spec=grid_spec,
        compiler_params=pltpu.CompilerParams(
            dimension_semantics=("parallel",),                # token axis across TCs on v7x
            vmem_limit_bytes=_vmem_limit_bytes(tile_m, E, H, VS)),
        cost_estimate=pl.CostEstimate(flops=int(flops),
                                      transcendentals=int(transcendentals),
                                      bytes_accessed=int(bytes_accessed)),
    )(ids2, w1_table, b1, w2_T, b2, gamma, beta)


# ---------------------------------------------------------------------------
# LabelEmbedder (JAX/Pallas version)
# ---------------------------------------------------------------------------
class LabelEmbedder:
    def __init__(self, emb_dim=32, num_classes=2, input_dim=77, hidden_dim=128,
                 vocab_size=64, seed=0):
        self.emb_dim = emb_dim
        self.hidden_dim = hidden_dim
        self.input_dim = input_dim      # max sequence length
        self.vocab_size = vocab_size

        key = jax.random.PRNGKey(seed)
        ks = jax.random.split(key, 4)
        s = 0.02
        # Frozen text-encoder parameters. Matmul operands stored in bf16
        # (MXU-native; no int8/fp8 path attempted — v7x MXU has no int8 and
        # fp8 is not a drop-in for these tiny frozen weights). Biases and
        # LayerNorm affine kept in f32.
        tok_emb = s * jax.random.normal(ks[0], (vocab_size, emb_dim), jnp.float32)
        pos_emb = s * jax.random.normal(ks[1], (input_dim, emb_dim), jnp.float32)
        w1 = s * jax.random.normal(ks[2], (emb_dim, hidden_dim), jnp.float32)
        w2 = s * jax.random.normal(ks[3], (hidden_dim, emb_dim), jnp.float32)

        # Fold the frozen embedding table into W1 (exact, since the encoder is
        # frozen): W1_table[H, V+P] = W1ᵀ[H, E] @ [tok_emb; pos_emb]ᵀ[E, V+P].
        table_T = jnp.concatenate([tok_emb, pos_emb], axis=0).T          # [E, V+P] f32
        self.w1_table = jnp.dot(w1.T, table_T).astype(jnp.bfloat16)      # [H, V+P] bf16
        self.w2_T = w2.T.astype(jnp.bfloat16)                            # [E, H]   bf16
        self.b1_col = jnp.zeros((hidden_dim, 1), jnp.float32)
        self.b2_col = jnp.zeros((emb_dim, 1), jnp.float32)
        self.gamma_col = jnp.ones((emb_dim, 1), jnp.float32)
        self.beta_col = jnp.zeros((emb_dim, 1), jnp.float32)

    def _tile_m(self, M):
        # Tokens map to lanes. Per-token VMEM cost is ~1 KB, so tiles of up to
        # 4096 tokens stay far under VMEM limits; keep >= 2 grid steps when M
        # allows so the "parallel" token axis splits across both v7x TCs.
        m128 = _round_up(M, 128)
        if m128 >= 256:
            return min(4096, _round_up((m128 + 1) // 2, 128))
        return m128

    def __call__(self, condition):
        """condition: int32 token ids [B, S] -> embeddings [B, S, emb_dim]."""
        B, S = condition.shape
        M = B * S
        E, V = self.emb_dim, self.vocab_size

        # Frozen encoder: emulate requires_grad_(False) / torch.no_grad().
        w1t, b1, w2_T, b2, gamma, beta = [
            jax.lax.stop_gradient(p) for p in
            (self.w1_table, self.b1_col, self.w2_T, self.b2_col,
             self.gamma_col, self.beta_col)]

        tile_m = self._tile_m(M)
        M_pad = _round_up(_round_up(M, 128), tile_m)

        # Note: clip silently clamps out-of-range ids (PyTorch nn.Embedding
        # would raise); acceptable for this synthetic frozen encoder.
        tok = jnp.clip(condition.reshape(-1).astype(jnp.int32), 0, V - 1)
        pos = jnp.arange(M, dtype=jnp.int32) % S
        tok_p = jnp.zeros((M_pad,), jnp.int32).at[:M].set(tok)
        pos_p = jnp.zeros((M_pad,), jnp.int32).at[:M].set(pos)
        ids2 = jnp.stack([tok_p, V + pos_p], axis=0)            # [2, M_pad]

        out_T = _run_text_encoder(ids2, w1t, b1, w2_T, b2,
                                  gamma, beta, tile_m)          # [E, M_pad], lane-dense
        # Layout plumbing back to [B, S, E] (cheap XLA transpose of the slab).
        return out_T[:, :M].T.reshape(B, S, E)


# ---------------------------------------------------------------------------
# Pure-JAX reference (mirrors the kernel's folded-table / bf16 path exactly)
# ---------------------------------------------------------------------------
def _reference(emb, condition):
    B, S = condition.shape
    M = B * S
    E, V = emb.emb_dim, emb.vocab_size
    tok = jnp.clip(condition.reshape(-1).astype(jnp.int32), 0, V - 1)
    pos = jnp.arange(M, dtype=jnp.int32) % S

    w1t = emb.w1_table.astype(jnp.float32)                         # [H, V+P]
    h = w1t[:, tok] + w1t[:, V + pos] + emb.b1_col                 # [H, M]
    act = (h * jax.nn.sigmoid(h)).astype(jnp.bfloat16)
    y = jnp.dot(emb.w2_T, act, preferred_element_type=jnp.float32) + emb.b2_col   # [E, M]

    inv_e = 1.0 / E
    mean = jnp.sum(y, axis=0, keepdims=True) * inv_e
    meansq = jnp.sum(y * y, axis=0, keepdims=True) * inv_e
    var = meansq - mean * mean
    yn = (y - mean) * jax.lax.rsqrt(var + 1e-5)
    out_T = yn * emb.gamma_col + emb.beta_col                      # [E, M]
    return out_T.T.reshape(B, S, E)


if __name__ == "__main__":
    B, S = 2, 8          # batch=2, seq=8 (small stand-in for input_dim=77)
    emb_dim, hidden_dim, vocab = 32, 128, 64

    key = jax.random.PRNGKey(0)
    condition = jax.random.randint(key, (B, S), 0, vocab, dtype=jnp.int32)

    embedder = LabelEmbedder(emb_dim=emb_dim, input_dim=S,
                             hidden_dim=hidden_dim, vocab_size=vocab, seed=0)

    c = embedder(condition)
    jax.block_until_ready(c)

    ref = _reference(embedder, condition)
    assert c.shape == (B, S, emb_dim), c.shape
    assert jnp.allclose(c, ref, atol=1e-3, rtol=1e-3), \
        f"mismatch vs reference: {float(jnp.max(jnp.abs(c - ref)))}"

    print("KERNEL_OK")
</pallas_src>

<mosaic_0001>
module attributes {stable_mosaic.version = 11 : i64} {
  func.func @_text_encoder_kernel(%arg0: i32, %arg1: memref<2x128xi32, #tpu.memory_space<vmem>>, %arg2: memref<128x72xbf16, #tpu.memory_space<vmem>>, %arg3: memref<128x1xf32, #tpu.memory_space<vmem>>, %arg4: memref<32x128xbf16, #tpu.memory_space<vmem>>, %arg5: memref<32x1xf32, #tpu.memory_space<vmem>>, %arg6: memref<32x1xf32, #tpu.memory_space<vmem>>, %arg7: memref<32x1xf32, #tpu.memory_space<vmem>>, %arg8: memref<32x128xf32, #tpu.memory_space<vmem>>) attributes {dimension_semantics = [#tpu.dimension_semantics<parallel>], iteration_bounds = array<i64: 1>, scalar_prefetch = 0 : i64, scratch_operands = 0 : i64, tpu.core_type = #tpu.core_type<tc>, window_params = [{transform_indices = @transform_0, window_bounds = array<i64: 2, 128>}, {pipeline_mode = #tpu.pipeline_mode<synchronous>, transform_indices = @transform_1, window_bounds = array<i64: 128, 72>}, {pipeline_mode = #tpu.pipeline_mode<synchronous>, transform_indices = @transform_2, window_bounds = array<i64: 128, 1>}, {pipeline_mode = #tpu.pipeline_mode<synchronous>, transform_indices = @transform_3, window_bounds = array<i64: 32, 128>}, {pipeline_mode = #tpu.pipeline_mode<synchronous>, transform_indices = @transform_4, window_bounds = array<i64: 32, 1>}, {pipeline_mode = #tpu.pipeline_mode<synchronous>, transform_indices = @transform_5, window_bounds = array<i64: 32, 1>}, {pipeline_mode = #tpu.pipeline_mode<synchronous>, transform_indices = @transform_6, window_bounds = array<i64: 32, 1>}, {transform_indices = @transform_7, window_bounds = array<i64: 32, 128>}]} {
    %c0 = arith.constant 0 : index
    %c0_0 = arith.constant 0 : index
    %0 = vector.load %arg1[%c0, %c0_0] : memref<2x128xi32, #tpu.memory_space<vmem>>, vector<2x128xi32>
    %1 = vector.extract_strided_slice %0 {offsets = [0, 0], sizes = [1, 128], strides = [1, 1]} : vector<2x128xi32> to vector<1x128xi32>
    %2 = vector.extract_strided_slice %0 {offsets = [1, 0], sizes = [1, 128], strides = [1, 1]} : vector<2x128xi32> to vector<1x128xi32>
    %3 = tpu.iota {dimensions = array<i32: 0>} : vector<72x128xi32>
    %4 = vector.broadcast %1 : vector<1x128xi32> to vector<72x128xi32>
    %5 = arith.cmpi eq, %3, %4 : vector<72x128xi32>
    %6 = vector.broadcast %2 : vector<1x128xi32> to vector<72x128xi32>
    %7 = arith.cmpi eq, %3, %6 : vector<72x128xi32>
    %8 = arith.ori %5, %7 : vector<72x128xi1>
    %9 = arith.extui %8 : vector<72x128xi1> to vector<72x128xi32>
    %10 = arith.sitofp %9 : vector<72x128xi32> to vector<72x128xf32>
    %11 = arith.truncf %10 : vector<72x128xf32> to vector<72x128xbf16>
    %c0_1 = arith.constant 0 : index
    %c0_2 = arith.constant 0 : index
    %12 = vector.load %arg2[%c0_1, %c0_2] : memref<128x72xbf16, #tpu.memory_space<vmem>>, vector<128x72xbf16>
    %cst = arith.constant dense<0.000000e+00> : vector<128x128xf32>
    %13 = tpu.matmul %12, %11, %cst {dimension_numbers = #tpu.dot_dimension_numbers<[1], [0], [0], [1], [0, 0, 1, 1], [], []>} : vector<128x72xbf16>, vector<72x128xbf16>, vector<128x128xf32> -> vector<128x128xf32>
    %c0_3 = arith.constant 0 : index
    %c0_4 = arith.constant 0 : index
    %14 = vector.load %arg3[%c0_3, %c0_4] : memref<128x1xf32, #tpu.memory_space<vmem>>, vector<128x1xf32>
    %15 = vector.broadcast %14 : vector<128x1xf32> to vector<128x128xf32>
    %16 = arith.addf %13, %15 : vector<128x128xf32>
    %17 = arith.negf %16 : vector<128x128xf32>
    %18 = math.exp %17 : vector<128x128xf32>
    %cst_5 = arith.constant 1.000000e+00 : f32
    %19 = vector.broadcast %cst_5 : f32 to vector<128x128xf32>
    %20 = arith.addf %19, %18 : vector<128x128xf32>
    %21 = arith.divf %19, %20 : vector<128x128xf32>
    %22 = arith.mulf %16, %21 : vector<128x128xf32>
    %23 = arith.truncf %22 : vector<128x128xf32> to vector<128x128xbf16>
    %c0_6 = arith.constant 0 : index
    %c0_7 = arith.constant 0 : index
    %24 = vector.load %arg4[%c0_6, %c0_7] : memref<32x128xbf16, #tpu.memory_space<vmem>>, vector<32x128xbf16>
    %cst_8 = arith.constant dense<0.000000e+00> : vector<32x128xf32>
    %25 = tpu.matmul %24, %23, %cst_8 {dimension_numbers = #tpu.dot_dimension_numbers<[1], [0], [0], [1], [0, 0, 1, 1], [], []>} : vector<32x128xbf16>, vector<128x128xbf16>, vector<32x128xf32> -> vector<32x128xf32>
    %c0_9 = arith.constant 0 : index
    %c0_10 = arith.constant 0 : index
    %26 = vector.load %arg5[%c0_9, %c0_10] : memref<32x1xf32, #tpu.memory_space<vmem>>, vector<32x1xf32>
    %27 = vector.broadcast %26 : vector<32x1xf32> to vector<32x128xf32>
    %28 = arith.addf %25, %27 : vector<32x128xf32>
    %cst_11 = arith.constant dense<0.000000e+00> : vector<128xf32>
    %29 = vector.multi_reduction <add>, %28, %cst_11 [0] : vector<32x128xf32> to vector<128xf32>
    %30 = vector.shape_cast %29 : vector<128xf32> to vector<1x128xf32>
    %cst_12 = arith.constant 3.125000e-02 : f32
    %31 = vector.broadcast %cst_12 : f32 to vector<1x128xf32>
    %32 = arith.mulf %30, %31 : vector<1x128xf32>
    %33 = arith.mulf %28, %28 : vector<32x128xf32>
    %cst_13 = arith.constant dense<0.000000e+00> : vector<128xf32>
    %34 = vector.multi_reduction <add>, %33, %cst_13 [0] : vector<32x128xf32> to vector<128xf32>
    %35 = vector.shape_cast %34 : vector<128xf32> to vector<1x128xf32>
    %cst_14 = arith.constant 3.125000e-02 : f32
    %36 = vector.broadcast %cst_14 : f32 to vector<1x128xf32>
    %37 = arith.mulf %35, %36 : vector<1x128xf32>
    %38 = arith.mulf %32, %32 : vector<1x128xf32>
    %39 = arith.subf %37, %38 : vector<1x128xf32>
    %40 = vector.broadcast %32 : vector<1x128xf32> to vector<32x128xf32>
    %41 = arith.subf %28, %40 : vector<32x128xf32>
    %cst_15 = arith.constant 9.99999974E-6 : f32
    %42 = vector.broadcast %cst_15 : f32 to vector<1x128xf32>
    %43 = arith.addf %39, %42 : vector<1x128xf32>
    %44 = math.rsqrt %43 : vector<1x128xf32>
    %45 = vector.broadcast %44 : vector<1x128xf32> to vector<32x128xf32>
    %46 = arith.mulf %41, %45 : vector<32x128xf32>
    %c0_16 = arith.constant 0 : index
    %c0_17 = arith.constant 0 : index
    %47 = vector.load %arg6[%c0_16, %c0_17] : memref<32x1xf32, #tpu.memory_space<vmem>>, vector<32x1xf32>
    %48 = vector.broadcast %47 : vector<32x1xf32> to vector<32x128xf32>
    %49 = arith.mulf %46, %48 : vector<32x128xf32>
    %c0_18 = arith.constant 0 : index
    %c0_19 = arith.constant 0 : index
    %50 = vector.load %arg7[%c0_18, %c0_19] : memref<32x1xf32, #tpu.memory_space<vmem>>, vector<32x1xf32>
    %51 = vector.broadcast %50 : vector<32x1xf32> to vector<32x128xf32>
    %52 = arith.addf %49, %51 : vector<32x128xf32>
    %c0_20 = arith.constant 0 : index
    %c0_21 = arith.constant 0 : index
    %53 = vector.load %arg8[%c0_20, %c0_21] : memref<32x128xf32, #tpu.memory_space<vmem>>, vector<32x128xf32>
    tpu.vector_store %arg8[%c0_20, %c0_21], %52 {strides = array<i32>} : memref<32x128xf32, #tpu.memory_space<vmem>>, vector<32x128xf32>,
    return
  }
  func.func @transform_0(%arg0: i32) -> (i32, i32) {
    %c0_i32 = arith.constant 0 : i32
    %c0_i32_0 = arith.constant 0 : i32
    return %c0_i32, %arg0 : i32, i32
  }
  func.func @transform_1(%arg0: i32) -> (i32, i32) {
    %c0_i32 = arith.constant 0 : i32
    %c0_i32_0 = arith.constant 0 : i32
    %c0_i32_1 = arith.constant 0 : i32
    return %c0_i32, %c0_i32_0 : i32, i32
  }
  func.func @transform_2(%arg0: i32) -> (i32, i32) {
    %c0_i32 = arith.constant 0 : i32
    %c0_i32_0 = arith.constant 0 : i32
    %c0_i32_1 = arith.constant 0 : i32
    return %c0_i32, %c0_i32_0 : i32, i32
  }
  func.func @transform_3(%arg0: i32) -> (i32, i32) {
    %c0_i32 = arith.constant 0 : i32
    %c0_i32_0 = arith.constant 0 : i32
    %c0_i32_1 = arith.constant 0 : i32
    return %c0_i32, %c0_i32_0 : i32, i32
  }
  func.func @transform_4(%arg0: i32) -> (i32, i32) {
    %c0_i32 = arith.constant 0 : i32
    %c0_i32_0 = arith.constant 0 : i32
    %c0_i32_1 = arith.constant 0 : i32
    return %c0_i32, %c0_i32_0 : i32, i32
  }
  func.func @transform_5(%arg0: i32) -> (i32, i32) {
    %c0_i32 = arith.constant 0 : i32
    %c0_i32_0 = arith.constant 0 : i32
    %c0_i32_1 = arith.constant 0 : i32
    return %c0_i32, %c0_i32_0 : i32, i32
  }
  func.func @transform_6(%arg0: i32) -> (i32, i32) {
    %c0_i32 = arith.constant 0 : i32
    %c0_i32_0 = arith.constant 0 : i32
    %c0_i32_1 = arith.constant 0 : i32
    return %c0_i32, %c0_i32_0 : i32, i32
  }
  func.func @transform_7(%arg0: i32) -> (i32, i32) {
    %c0_i32 = arith.constant 0 : i32
    %c0_i32_0 = arith.constant 0 : i32
    return %c0_i32, %arg0 : i32, i32
  }
}

</mosaic_0001>

<llo_original>
// kernel: tpu_custom_call.1
$region0: #{tpu_custom_call.1}
  #allocation0 [shape = 'u32[]', space=smem, size = 0x4, offset = 0x4, fixed_abs, tag = 'smem constant byte address 0x4 - core index']
  #allocation1 [shape = 'u32[144,128]{1,0:T(1,128)}', space=vmem, size = 0x12000, scoped, tag = 'internal scratch']
  %s0 = inlined_call_operand.vmem [shape: s32[2,128], index: 0, kind: input, shape index: {}]
  %s1 = inlined_call_operand.vmem [shape: bf16[128,72], index: 1, kind: input, shape index: {}]
  %s2 = inlined_call_operand.vmem [shape: f32[128,1], index: 2, kind: input, shape index: {}]
  %s3 = inlined_call_operand.vmem [shape: bf16[32,128], index: 3, kind: input, shape index: {}]
  %s4 = inlined_call_operand.vmem [shape: f32[32,1], index: 4, kind: input, shape index: {}]
  %s5 = inlined_call_operand.vmem [shape: f32[32,1], index: 5, kind: input, shape index: {}]
  %s6 = inlined_call_operand.vmem [shape: f32[32,1], index: 6, kind: input, shape index: {}]
  %s7 = inlined_call_operand.hbm [shape: f32[32,128], index: 7, kind: output, shape index: {}]
  %s8 = sld [smem:[#allocation0]]
  $region38: #{tpu_custom_call.1} parent=0
    _
  %s10 = ssub.s32 1, %s8
  %s11 = scalar_select 0, %s10, %s8
  $region1: #{tpu_custom_call.1} parent=0
    #allocation2 [shape = 'u8[16384]{0}', space=vmem, size = 0x4000, scoped, tag = 'output window, operand 0, single buffered']
    #allocation3 [shape = 's32[1]{0}', space=sflag, size = 0x4, scoped, tag = 'scoped memory for tpu_custom_call.1']
    %12 = vsyncpa [#allocation3], 0
    // Predicated region
    $region2: #{tpu_custom_call.1} parent=1 // pred_check
      _
    $region3: #{tpu_custom_call.1} parent=1 // pred_check_branch
      %14 = sbr.rel (0) target = $region5
    $region4: #{tpu_custom_call.1} parent=1 // pred_region
      _
    $region5: #{tpu_custom_call.1} parent=1 // pred_fallthru
      _
    // Predicated region
    $region6: #{tpu_custom_call.1} parent=1 // pred_check
      _
    $region7: #{tpu_custom_call.1} parent=1 // pred_check_branch
      %16 = sbr.rel (0) target = $region9
    $region8: #{tpu_custom_call.1} parent=1 // pred_region
      _
    $region9: #{tpu_custom_call.1} parent=1 // pred_fallthru
      _
    // Predicated region
    $region10: #{tpu_custom_call.1} parent=1 // pred_check
      _
    $region11: #{tpu_custom_call.1} parent=1 // pred_check_branch
      %18 = sbr.rel (0) target = $region13
    $region12: #{tpu_custom_call.1} parent=1 // pred_region
      _
    $region13: #{tpu_custom_call.1} parent=1 // pred_fallthru
      _
    // Predicated region
    $region14: #{tpu_custom_call.1} parent=1 // pred_check
      _
    $region15: #{tpu_custom_call.1} parent=1 // pred_check_branch
      %20 = sbr.rel (0) target = $region17
    $region16: #{tpu_custom_call.1} parent=1 // pred_region
      _
    $region17: #{tpu_custom_call.1} parent=1 // pred_fallthru
      _
    // Predicated region
    $region18: #{tpu_custom_call.1} parent=1 // pred_check
      _
    $region19: #{tpu_custom_call.1} parent=1 // pred_check_branch
      %22 = sbr.rel (0) target = $region21
    $region20: #{tpu_custom_call.1} parent=1 // pred_region
      _
    $region21: #{tpu_custom_call.1} parent=1 // pred_fallthru
      _
    // Predicated region
    $region22: #{tpu_custom_call.1} parent=1 // pred_check
      _
    $region23: #{tpu_custom_call.1} parent=1 // pred_check_branch
      %24 = sbr.rel (0) target = $region25
    $region24: #{tpu_custom_call.1} parent=1 // pred_region
      _
    $region25: #{tpu_custom_call.1} parent=1 // pred_fallthru
      _
    // Predicated region
    $region26: #{tpu_custom_call.1} parent=1 // pred_check
      _
    $region27: #{tpu_custom_call.1} parent=1 // pred_check_branch
      %26 = sbr.rel (0) target = $region29
    $region28: #{tpu_custom_call.1} parent=1 // pred_region
      _
    $region29: #{tpu_custom_call.1} parent=1 // pred_fallthru
      _
    %v28 = vld [vmem:[%s0] sm:$0x3]
    %v29 = vlaneseq
    %v30 = vshrl.u32 %v29, 7
    %v31 = vadd.s32 %v30, 8
    %v32 = vadd.s32 %v30, 16
    %v33 = vadd.s32 %v30, 24
    %v34 = vadd.s32 %v30, 32
    %v35 = vadd.s32 %v30, 40
    %v36 = vadd.s32 %v30, 48
    %v37 = vadd.s32 %v30, 56
    %v38 = vadd.s32 %v30, 64
    %v39 = vlaneseq
    %v40 = vshrl.u32 %v39, 7
    %v41 = vsub.s32 0, %v40
    %v42 = vrot.slane %v28, %v41
    %vm43 = vcmp.eq.s32.totalorder %v30, %v42
    %vm44 = vcmp.eq.s32.totalorder %v31, %v42
    %vm45 = vcmp.eq.s32.totalorder %v32, %v42
    %vm46 = vcmp.eq.s32.totalorder %v33, %v42
    %vm47 = vcmp.eq.s32.totalorder %v34, %v42
    %vm48 = vcmp.eq.s32.totalorder %v35, %v42
    %vm49 = vcmp.eq.s32.totalorder %v36, %v42
    %vm50 = vcmp.eq.s32.totalorder %v37, %v42
    %vm51 = vcmp.eq.s32.totalorder %v38, %v42
    %v52 = vlaneseq
    %v53 = vshrl.u32 %v52, 7
    %v54 = vsub.s32 1, %v53
    %v55 = vrot.slane %v28, %v54
    %vm56 = vcmp.eq.s32.totalorder %v30, %v55
    %vm57 = vcmp.eq.s32.totalorder %v31, %v55
    %vm58 = vcmp.eq.s32.totalorder %v32, %v55
    %vm59 = vcmp.eq.s32.totalorder %v33, %v55
    %vm60 = vcmp.eq.s32.totalorder %v34, %v55
    %vm61 = vcmp.eq.s32.totalorder %v35, %v55
    %vm62 = vcmp.eq.s32.totalorder %v36, %v55
    %vm63 = vcmp.eq.s32.totalorder %v37, %v55
    %vm64 = vcmp.eq.s32.totalorder %v38, %v55
    %vm65 = vmor %vm43, %vm56
    %vm66 = vmor %vm44, %vm57
    %vm67 = vmor %vm45, %vm58
    %vm68 = vmor %vm46, %vm59
    %vm69 = vmor %vm47, %vm60
    %vm70 = vmor %vm48, %vm61
    %vm71 = vmor %vm49, %vm62
    %vm72 = vmor %vm50, %vm63
    %vm73 = vmor %vm51, %vm64
    %v74 = vsel %vm65, 1, 0
    %v75 = vsel %vm66, 1, 0
    %v76 = vsel %vm67, 1, 0
    %v77 = vsel %vm68, 1, 0
    %v78 = vsel %vm69, 1, 0
    %v79 = vsel %vm70, 1, 0
    %v80 = vsel %vm71, 1, 0
    %v81 = vsel %vm72, 1, 0
    %v82 = vsel %vm73, 1, 0
    %v83 = vcvt.s32.f32 %v74
    %v84 = vcvt.s32.f32 %v75
    %v85 = vcvt.s32.f32 %v76
    %v86 = vcvt.s32.f32 %v77
    %v87 = vcvt.s32.f32 %v78
    %v88 = vcvt.s32.f32 %v79
    %v89 = vcvt.s32.f32 %v80
    %v90 = vcvt.s32.f32 %v81
    %v91 = vcvt.s32.f32 %v82
    %v92 = vpack.c.bf16 %v84, %v83
    %v93 = vpack.c.bf16 %v86, %v85
    %v94 = vpack.c.bf16 %v88, %v87
    %v95 = vpack.c.bf16 %v90, %v89
    %v96 = vpack.c.bf16 %v91, %v91
    %v97 = vld [vmem:[%s1] sm:$0xf]
    %v98 = vld [vmem:[%s1 + $0x4] sm:$0xf]
    %v99 = vld [vmem:[%s1 + $0x8] sm:$0xf]
    %v100 = vld [vmem:[%s1 + $0xc] sm:$0xf]
    %v101 = vld [vmem:[%s1 + $0x10] sm:$0xf]
    %v102 = vld [vmem:[%s1 + $0x14] sm:$0xf]
    %v103 = vld [vmem:[%s1 + $0x18] sm:$0xf]
    %v104 = vld [vmem:[%s1 + $0x1c] sm:$0xf]
    %v105 = vld [vmem:[%s1 + $0x20] sm:$0xf]
    %v106 = vld [vmem:[%s1 + $0x24] sm:$0xf]
    %v107 = vld [vmem:[%s1 + $0x28] sm:$0xf]
    %v108 = vld [vmem:[%s1 + $0x2c] sm:$0xf]
    %v109 = vld [vmem:[%s1 + $0x30] sm:$0xf]
    %v110 = vld [vmem:[%s1 + $0x34] sm:$0xf]
    %v111 = vld [vmem:[%s1 + $0x38] sm:$0xf]
    %v112 = vld [vmem:[%s1 + $0x3c] sm:$0xf]
    %v113 = vld [vmem:[%s2] sm:$0xff]
    %v114 = vld [vmem:[%s2 + $0x8] sm:$0xff]
    %v115 = vld [vmem:[%s2 + $0x10] sm:$0xff]
    %v116 = vld [vmem:[%s2 + $0x18] sm:$0xff]
    %v117 = vld [vmem:[%s2 + $0x20] sm:$0xff]
    %v118 = vld [vmem:[%s2 + $0x28] sm:$0xff]
    %v119 = vld [vmem:[%s2 + $0x30] sm:$0xff]
    %v120 = vld [vmem:[%s2 + $0x38] sm:$0xff]
    %v121 = vld [vmem:[%s2 + $0x40] sm:$0xff]
    %v122 = vld [vmem:[%s2 + $0x48] sm:$0xff]
    %v123 = vld [vmem:[%s2 + $0x50] sm:$0xff]
    %v124 = vld [vmem:[%s2 + $0x58] sm:$0xff]
    %v125 = vld [vmem:[%s2 + $0x60] sm:$0xff]
    %v126 = vld [vmem:[%s2 + $0x68] sm:$0xff]
    %v127 = vld [vmem:[%s2 + $0x70] sm:$0xff]
    %v128 = vld [vmem:[%s2 + $0x78] sm:$0xff]
    %130 = vset.pattern.permute.xlu0 0
    %131 = vperm.xlu0 %130, %v113
    %v132 = vpop.permute.xlu0 %131
    %135 = vset.pattern.permute.xlu0 0
    %136 = vperm.xlu0 %135, %v114
    %v137 = vpop.permute.xlu0 %136
    %140 = vset.pattern.permute.xlu0 0
    %141 = vperm.xlu0 %140, %v115
    %v142 = vpop.permute.xlu0 %141
    %145 = vset.pattern.permute.xlu0 0
    %146 = vperm.xlu0 %145, %v116
    %v147 = vpop.permute.xlu0 %146
    %150 = vset.pattern.permute.xlu0 0
    %151 = vperm.xlu0 %150, %v117
    %v152 = vpop.permute.xlu0 %151
    %155 = vset.pattern.permute.xlu0 0
    %156 = vperm.xlu0 %155, %v118
    %v157 = vpop.permute.xlu0 %156
    %160 = vset.pattern.permute.xlu0 0
    %161 = vperm.xlu0 %160, %v119
    %v162 = vpop.permute.xlu0 %161
    %165 = vset.pattern.permute.xlu0 0
    %166 = vperm.xlu0 %165, %v120
    %v167 = vpop.permute.xlu0 %166
    %170 = vset.pattern.permute.xlu0 0
    %171 = vperm.xlu0 %170, %v121
    %v172 = vpop.permute.xlu0 %171
    %175 = vset.pattern.permute.xlu0 0
    %176 = vperm.xlu0 %175, %v122
    %v177 = vpop.permute.xlu0 %176
    %180 = vset.pattern.permute.xlu0 0
    %181 = vperm.xlu0 %180, %v123
    %v182 = vpop.permute.xlu0 %181
    %185 = vset.pattern.permute.xlu0 0
    %186 = vperm.xlu0 %185, %v124
    %v187 = vpop.permute.xlu0 %186
    %190 = vset.pattern.permute.xlu0 0
    %191 = vperm.xlu0 %190, %v125
    %v192 = vpop.permute.xlu0 %191
    %195 = vset.pattern.permute.xlu0 0
    %196 = vperm.xlu0 %195, %v126
    %v197 = vpop.permute.xlu0 %196
    %200 = vset.pattern.permute.xlu0 0
    %201 = vperm.xlu0 %200, %v127
    %v202 = vpop.permute.xlu0 %201
    %205 = vset.pattern.permute.xlu0 0
    %206 = vperm.xlu0 %205, %v128
    %v207 = vpop.permute.xlu0 %206
    %v225 = vunpack.c.l.b16 %v97
    %v226 = vunpack.c.l.b16 %v98
    %v227 = vunpack.c.l.b16 %v99
    %v228 = vunpack.c.l.b16 %v100
    %v229 = vunpack.c.l.b16 %v101
    %v230 = vunpack.c.l.b16 %v102
    %v231 = vunpack.c.l.b16 %v103
    %v232 = vunpack.c.l.b16 %v104
    %v233 = vunpack.c.l.b16 %v105
    %v234 = vunpack.c.l.b16 %v106
    %v235 = vunpack.c.l.b16 %v107
    %v236 = vunpack.c.l.b16 %v108
    %v237 = vunpack.c.l.b16 %v109
    %v238 = vunpack.c.l.b16 %v110
    %v239 = vunpack.c.l.b16 %v111
    %v240 = vunpack.c.l.b16 %v112
    %v241 = vpack.c.b16 %v226, %v225
    %v242 = vpack.c.b16 %v228, %v227
    %v243 = vpack.c.b16 %v230, %v229
    %v244 = vpack.c.b16 %v232, %v231
    %v245 = vpack.c.b16 %v234, %v233
    %v246 = vpack.c.b16 %v236, %v235
    %v247 = vpack.c.b16 %v238, %v237
    %v248 = vpack.c.b16 %v240, %v239
    %vm249 = vcmask 588800
    %v251 = vsel %vm249, %v241, 0
    %v254 = vsel %vm249, %v242, 0
    %v257 = vsel %vm249, %v243, 0
    %v260 = vsel %vm249, %v244, 0
    %v263 = vsel %vm249, %v245, 0
    %v266 = vsel %vm249, %v246, 0
    %v269 = vsel %vm249, %v247, 0
    %v272 = vsel %vm249, %v248, 0
    %vm274 = vcmask 1043456
    %v276 = vsel %vm274, %v96, 0
    %278 = vmatprep.subr.bf16.mxu0 0
    %279 = vmatpush1.bf16.msra.mxu0 %v92
    %280 = vmatprep.subr.bf16.mxu0 0
    %281 = vmatpush1.bf16.msra.mxu0 %v93
    %282 = vmatprep.subr.bf16.mxu0 0
    %283 = vmatpush1.bf16.msra.mxu0 %v94
    %284 = vmatprep.subr.bf16.mxu0 0
    %285 = vmatpush1.bf16.msra.mxu0 %v95
    %286 = vmatprep.subr.bf16.mxu0 0
    %287 = vmatpush1.bf16.msra.mxu0 %v276
    %288 = vmatprep.subr.bf16.mxu0 0
    %289 = vmatpush1.bf16.msra.mxu0 0
    %290 = vmatprep.subr.bf16.mxu0 0
    %291 = vmatpush1.bf16.msra.mxu0 0
    %292 = vmatprep.subr.bf16.mxu0 0
    %293 = vmatpush1.bf16.msra.mxu0 0
    %294 = vmatprep.subr.bf16.mxu0 0
    %295 = vmatpush1.bf16.msra.mxu0 0
    %296 = vmatprep.subr.bf16.mxu0 0
    %297 = vmatpush1.bf16.msra.mxu0 0
    %298 = vmatprep.subr.bf16.mxu0 0
    %299 = vmatpush1.bf16.msra.mxu0 0
    %300 = vmatprep.subr.bf16.mxu0 0
    %301 = vmatpush1.bf16.msra.mxu0 0
    %302 = vmatprep.subr.bf16.mxu0 0
    %303 = vmatpush1.bf16.msra.mxu0 0
    %304 = vmatprep.subr.bf16.mxu0 0
    %305 = vmatpush1.bf16.msra.mxu0 0
    %306 = vmatprep.subr.bf16.mxu0 0
    %307 = vmatpush1.bf16.msra.mxu0 0
    %308 = vmatprep.subr.bf16.mxu0 0
    %309 = vmatpush1.bf16.msra.mxu0 0
    %310 = vmatprep.mubr.bf16.mxu0 0
    %311 = vmatmul.mubr.bf16.gmra.mrb[0].mxu0 %v251
    %v312 = vpop.f32.mrb[0].mxu0
    %v313 = vadd.f32 %v132, %v312
    %v314 = vpop.f32.mrb[0].mxu0
    %v315 = vpop.f32.mrb[0].mxu0
    %v316 = vadd.f32 %v137, %v315
    %v317 = vpop.f32.mrb[0].mxu0
    %318 = vmatprep.mubr.bf16.mxu0 0
    %319 = vmatmul.mubr.bf16.gmra.mrb[0].mxu0 %v254
    %v320 = vpop.f32.mrb[0].mxu0
    %v321 = vadd.f32 %v142, %v320
    %v322 = vpop.f32.mrb[0].mxu0
    %v323 = vpop.f32.mrb[0].mxu0
    %v324 = vadd.f32 %v147, %v323
    %v325 = vpop.f32.mrb[0].mxu0
    %326 = vmatprep.mubr.bf16.mxu0 0
    %327 = vmatmul.mubr.bf16.gmra.mrb[0].mxu0 %v257
    %v328 = vpop.f32.mrb[0].mxu0
    %v329 = vadd.f32 %v152, %v328
    %v330 = vpop.f32.mrb[0].mxu0
    %v331 = vpop.f32.mrb[0].mxu0
    %v332 = vadd.f32 %v157, %v331
    %v333 = vpop.f32.mrb[0].mxu0
    %334 = vmatprep.mubr.bf16.mxu0 0
    %335 = vmatmul.mubr.bf16.gmra.mrb[0].mxu0 %v260
    %v336 = vpop.f32.mrb[0].mxu0
    %v337 = vadd.f32 %v162, %v336
    %v338 = vpop.f32.mrb[0].mxu0
    %v339 = vpop.f32.mrb[0].mxu0
    %v340 = vadd.f32 %v167, %v339
    %v341 = vpop.f32.mrb[0].mxu0
    %342 = vmatprep.mubr.bf16.mxu0 0
    %343 = vmatmul.mubr.bf16.gmra.mrb[0].mxu0 %v263
    %v344 = vpop.f32.mrb[0].mxu0
    %v345 = vadd.f32 %v172, %v344
    %v346 = vpop.f32.mrb[0].mxu0
    %v347 = vpop.f32.mrb[0].mxu0
    %v348 = vadd.f32 %v177, %v347
    %v349 = vpop.f32.mrb[0].mxu0
    %350 = vmatprep.mubr.bf16.mxu0 0
    %351 = vmatmul.mubr.bf16.gmra.mrb[0].mxu0 %v266
    %v352 = vpop.f32.mrb[0].mxu0
    %v353 = vadd.f32 %v182, %v352
    %v354 = vpop.f32.mrb[0].mxu0
    %v355 = vpop.f32.mrb[0].mxu0
    %v356 = vadd.f32 %v187, %v355
    %v357 = vpop.f32.mrb[0].mxu0
    %358 = vmatprep.mubr.bf16.mxu0 0
    %359 = vmatmul.mubr.bf16.gmra.mrb[0].mxu0 %v269
    %v360 = vpop.f32.mrb[0].mxu0
    %v361 = vadd.f32 %v192, %v360
    %v362 = vpop.f32.mrb[0].mxu0
    %v363 = vpop.f32.mrb[0].mxu0
    %v364 = vadd.f32 %v197, %v363
    %v365 = vpop.f32.mrb[0].mxu0
    %366 = vmatprep.mubr.bf16.mxu0 0
    %367 = vmatmul.mubr.bf16.gmra.mrb[0].mxu0 %v272
    %v368 = vpop.f32.mrb[0].mxu0
    %v369 = vadd.f32 %v202, %v368
    %v370 = vpop.f32.mrb[0].mxu0
    %v371 = vpop.f32.mrb[0].mxu0
    %v372 = vadd.f32 %v207, %v371
    %v373 = vpop.f32.mrb[0].mxu0
    %374 = vdwg.mxu0
    %v375 = vxor.u32 %v313, 2147483648
    %v376 = vxor.u32 %v316, 2147483648
    %v377 = vxor.u32 %v321, 2147483648
    %v378 = vxor.u32 %v324, 2147483648
    %v379 = vxor.u32 %v329, 2147483648
    %v380 = vxor.u32 %v332, 2147483648
    %v381 = vxor.u32 %v337, 2147483648
    %v382 = vxor.u32 %v340, 2147483648
    %v383 = vxor.u32 %v345, 2147483648
    %v384 = vxor.u32 %v348, 2147483648
    %v385 = vxor.u32 %v353, 2147483648
    %v386 = vxor.u32 %v356, 2147483648
    %v387 = vxor.u32 %v361, 2147483648
    %v388 = vxor.u32 %v364, 2147483648
    %v389 = vxor.u32 %v369, 2147483648
    %v390 = vxor.u32 %v372, 2147483648
    %v391 = vmul.f32 %v375, 1.442695
    %v392 = vpow.pop %v391
    %v393 = vmul.f32 %v376, 1.442695
    %v394 = vpow.pop %v393
    %v395 = vmul.f32 %v377, 1.442695
    %v396 = vpow.pop %v395
    %v397 = vmul.f32 %v378, 1.442695
    %v398 = vpow.pop %v397
    %v399 = vmul.f32 %v379, 1.442695
    %v400 = vpow.pop %v399
    %v401 = vmul.f32 %v380, 1.442695
    %v402 = vpow.pop %v401
    %v403 = vmul.f32 %v381, 1.442695
    %v404 = vpow.pop %v403
    %v405 = vmul.f32 %v382, 1.442695
    %v406 = vpow.pop %v405
    %v407 = vmul.f32 %v383, 1.442695
    %v408 = vpow.pop %v407
    %v409 = vmul.f32 %v384, 1.442695
    %v410 = vpow.pop %v409
    %v411 = vmul.f32 %v385, 1.442695
    %v412 = vpow.pop %v411
    %v413 = vmul.f32 %v386, 1.442695
    %v414 = vpow.pop %v413
    %v415 = vmul.f32 %v387, 1.442695
    %v416 = vpow.pop %v415
    %v417 = vmul.f32 %v388, 1.442695
    %v418 = vpow.pop %v417
    %v419 = vmul.f32 %v389, 1.442695
    %v420 = vpow.pop %v419
    %v421 = vmul.f32 %v390, 1.442695
    %v422 = vpow.pop %v421
    %v423 = vadd.f32 %v392, 1.0
    %v424 = vadd.f32 %v394, 1.0
    %v425 = vadd.f32 %v396, 1.0
    %v426 = vadd.f32 %v398, 1.0
    %v427 = vadd.f32 %v400, 1.0
    %v428 = vadd.f32 %v402, 1.0
    %v429 = vadd.f32 %v404, 1.0
    %v430 = vadd.f32 %v406, 1.0
    %v431 = vadd.f32 %v408, 1.0
    %v432 = vadd.f32 %v410, 1.0
    %v433 = vadd.f32 %v412, 1.0
    %v434 = vadd.f32 %v414, 1.0
    %v435 = vadd.f32 %v416, 1.0
    %v436 = vadd.f32 %v418, 1.0
    %v437 = vadd.f32 %v420, 1.0
    %v438 = vadd.f32 %v422, 1.0
    %v439 = vrcp.pop %v423
    %v440 = vmul.f32 1.0, %v439
    %v441 = vrcp.pop %v424
    %v442 = vmul.f32 1.0, %v441
    %v443 = vrcp.pop %v425
    %v444 = vmul.f32 1.0, %v443
    %v445 = vrcp.pop %v426
    %v446 = vmul.f32 1.0, %v445
    %v447 = vrcp.pop %v427
    %v448 = vmul.f32 1.0, %v447
    %v449 = vrcp.pop %v428
    %v450 = vmul.f32 1.0, %v449
    %v451 = vrcp.pop %v429
    %v452 = vmul.f32 1.0, %v451
    %v453 = vrcp.pop %v430
    %v454 = vmul.f32 1.0, %v453
    %v455 = vrcp.pop %v431
    %v456 = vmul.f32 1.0, %v455
    %v457 = vrcp.pop %v432
    %v458 = vmul.f32 1.0, %v457
    %v459 = vrcp.pop %v433
    %v460 = vmul.f32 1.0, %v459
    %v461 = vrcp.pop %v434
    %v462 = vmul.f32 1.0, %v461
    %v463 = vrcp.pop %v435
    %v464 = vmul.f32 1.0, %v463
    %v465 = vrcp.pop %v436
    %v466 = vmul.f32 1.0, %v465
    %v467 = vrcp.pop %v437
    %v468 = vmul.f32 1.0, %v467
    %v469 = vrcp.pop %v438
    %v470 = vmul.f32 1.0, %v469
    %v471 = vmul.f32 %v313, %v440
    %v472 = vmul.f32 %v316, %v442
    %v473 = vmul.f32 %v321, %v444
    %v474 = vmul.f32 %v324, %v446
    %v475 = vmul.f32 %v329, %v448
    %v476 = vmul.f32 %v332, %v450
    %v477 = vmul.f32 %v337, %v452
    %v478 = vmul.f32 %v340, %v454
    %v479 = vmul.f32 %v345, %v456
    %v480 = vmul.f32 %v348, %v458
    %v481 = vmul.f32 %v353, %v460
    %v482 = vmul.f32 %v356, %v462
    %v483 = vmul.f32 %v361, %v464
    %v484 = vmul.f32 %v364, %v466
    %v485 = vmul.f32 %v369, %v468
    %v486 = vmul.f32 %v372, %v470
    %v487 = vpack.c.bf16 %v472, %v471
    %v488 = vpack.c.bf16 %v474, %v473
    %v489 = vpack.c.bf16 %v476, %v475
    %v490 = vpack.c.bf16 %v478, %v477
    %v491 = vpack.c.bf16 %v480, %v479
    %v492 = vpack.c.bf16 %v482, %v481
    %v493 = vpack.c.bf16 %v484, %v483
    %v494 = vpack.c.bf16 %v486, %v485
    %v495 = vld [vmem:[%s3] sm:$0xf]
    %v496 = vld [vmem:[%s3 + $0x4] sm:$0xf]
    %v497 = vld [vmem:[%s3 + $0x8] sm:$0xf]
    %v498 = vld [vmem:[%s3 + $0xc] sm:$0xf]
    %v499 = vld [vmem:[%s4] sm:$0xff]
    %v500 = vld [vmem:[%s4 + $0x8] sm:$0xff]
    %v501 = vld [vmem:[%s4 + $0x10] sm:$0xff]
    %v502 = vld [vmem:[%s4 + $0x18] sm:$0xff]
    %504 = vset.pattern.permute.xlu0 0
    %505 = vperm.xlu0 %504, %v499
    %v506 = vpop.permute.xlu0 %505
    %509 = vset.pattern.permute.xlu0 0
    %510 = vperm.xlu0 %509, %v500
    %v511 = vpop.permute.xlu0 %510
    %514 = vset.pattern.permute.xlu0 0
    %515 = vperm.xlu0 %514, %v501
    %v516 = vpop.permute.xlu0 %515
    %519 = vset.pattern.permute.xlu0 0
    %520 = vperm.xlu0 %519, %v502
    %v521 = vpop.permute.xlu0 %520
    %v527 = vunpack.c.l.b16 %v495
    %v528 = vunpack.c.l.b16 %v496
    %v529 = vunpack.c.l.b16 %v497
    %v530 = vunpack.c.l.b16 %v498
    %v531 = vpack.c.b16 %v528, %v527
    %v532 = vpack.c.b16 %v530, %v529
    %535 = vmatprep.subr.bf16.mxu0 0
    %536 = vmatpush1.bf16.msra.mxu0 %v487
    %537 = vmatprep.subr.bf16.mxu0 0
    %538 = vmatpush1.bf16.msra.mxu0 %v488
    %539 = vmatprep.subr.bf16.mxu0 0
    %540 = vmatpush1.bf16.msra.mxu0 %v489
    %541 = vmatprep.subr.bf16.mxu0 0
    %542 = vmatpush1.bf16.msra.mxu0 %v490
    %543 = vmatprep.subr.bf16.mxu0 0
    %544 = vmatpush1.bf16.msra.mxu0 %v491
    %545 = vmatprep.subr.bf16.mxu0 0
    %546 = vmatpush1.bf16.msra.mxu0 %v492
    %547 = vmatprep.subr.bf16.mxu0 0
    %548 = vmatpush1.bf16.msra.mxu0 %v493
    %549 = vmatprep.subr.bf16.mxu0 0
    %550 = vmatpush1.bf16.msra.mxu0 %v494
    %551 = vmatprep.subr.bf16.mxu0 0
    %552 = vmatpush1.bf16.msra.mxu0 0
    %553 = vmatprep.subr.bf16.mxu0 0
    %554 = vmatpush1.bf16.msra.mxu0 0
    %555 = vmatprep.subr.bf16.mxu0 0
    %556 = vmatpush1.bf16.msra.mxu0 0
    %557 = vmatprep.subr.bf16.mxu0 0
    %558 = vmatpush1.bf16.msra.mxu0 0
    %559 = vmatprep.subr.bf16.mxu0 0
    %560 = vmatpush1.bf16.msra.mxu0 0
    %561 = vmatprep.subr.bf16.mxu0 0
    %562 = vmatpush1.bf16.msra.mxu0 0
    %563 = vmatprep.subr.bf16.mxu0 0
    %564 = vmatpush1.bf16.msra.mxu0 0
    %565 = vmatprep.subr.bf16.mxu0 0
    %566 = vmatpush1.bf16.msra.mxu0 0
    %567 = vmatprep.mubr.bf16.mxu0 0
    %568 = vmatmul.mubr.bf16.gmra.mrb[0].mxu0 %v531
    %v569 = vpop.f32.mrb[0].mxu0
    %v570 = vadd.f32 %v506, %v569
    %v571 = vpop.f32.mrb[0].mxu0
    %v572 = vpop.f32.mrb[0].mxu0
    %v573 = vadd.f32 %v511, %v572
    %v574 = vpop.f32.mrb[0].mxu0
    %575 = vmatprep.mubr.bf16.mxu0 0
    %576 = vmatmul.mubr.bf16.gmra.mrb[0].mxu0 %v532
    %v577 = vpop.f32.mrb[0].mxu0
    %v578 = vadd.f32 %v516, %v577
    %v579 = vpop.f32.mrb[0].mxu0
    %v580 = vpop.f32.mrb[0].mxu0
    %v581 = vadd.f32 %v521, %v580
    %v582 = vpop.f32.mrb[0].mxu0
    %583 = vdwg.mxu0
    %v584 = vadd.f32 %v570, %v573
    %v585 = vadd.f32 %v584, %v578
    %v586 = vadd.f32 %v585, %v581
    %v587 = vrot.slane %v586, 4
    %v588 = vadd.f32 %v586, %v587
    %v589 = vrot.slane %v588, 2
    %v590 = vadd.f32 %v588, %v589
    %v591 = vrot.slane %v590, 1
    %v592 = vadd.f32 %v590, %v591
    %v593 = vmul.f32 %v592, 0.03125
    %v594 = vmul.f32 %v570, %v570
    %v595 = vmul.f32 %v573, %v573
    %v596 = vmul.f32 %v578, %v578
    %v597 = vmul.f32 %v581, %v581
    %v598 = vadd.f32 %v594, %v595
    %v599 = vadd.f32 %v598, %v596
    %v600 = vadd.f32 %v599, %v597
    %v601 = vrot.slane %v600, 4
    %v602 = vadd.f32 %v600, %v601
    %v603 = vrot.slane %v602, 2
    %v604 = vadd.f32 %v602, %v603
    %v605 = vrot.slane %v604, 1
    %v606 = vadd.f32 %v604, %v605
    %v607 = vmul.f32 %v606, 0.03125
    %v608 = vmul.f32 %v593, %v593
    %v609 = vsub.f32 %v607, %v608
    %v610 = vsub.f32 %v570, %v593
    %v611 = vsub.f32 %v573, %v593
    %v612 = vsub.f32 %v578, %v593
    %v613 = vsub.f32 %v581, %v593
    %v614 = vadd.f32 %v609, 1e-05
    %v615 = vrsqrt.pop %v614
    %v616 = vmul.f32 %v610, %v615
    %v617 = vmul.f32 %v611, %v615
    %v618 = vmul.f32 %v612, %v615
    %v619 = vmul.f32 %v613, %v615
    %v620 = vld [vmem:[%s5] sm:$0xff]
    %v621 = vld [vmem:[%s5 + $0x8] sm:$0xff]
    %v622 = vld [vmem:[%s5 + $0x10] sm:$0xff]
    %v623 = vld [vmem:[%s5 + $0x18] sm:$0xff]
    %625 = vset.pattern.permute.xlu0 0
    %626 = vperm.xlu0 %625, %v620
    %v627 = vpop.permute.xlu0 %626
    %630 = vset.pattern.permute.xlu0 0
    %631 = vperm.xlu0 %630, %v621
    %v632 = vpop.permute.xlu0 %631
    %635 = vset.pattern.permute.xlu0 0
    %636 = vperm.xlu0 %635, %v622
    %v637 = vpop.permute.xlu0 %636
    %640 = vset.pattern.permute.xlu0 0
    %641 = vperm.xlu0 %640, %v623
    %v642 = vpop.permute.xlu0 %641
    %v644 = vmul.f32 %v616, %v627
    %v645 = vmul.f32 %v617, %v632
    %v646 = vmul.f32 %v618, %v637
    %v647 = vmul.f32 %v619, %v642
    %v648 = vld [vmem:[%s6] sm:$0xff]
    %v649 = vld [vmem:[%s6 + $0x8] sm:$0xff]
    %v650 = vld [vmem:[%s6 + $0x10] sm:$0xff]
    %v651 = vld [vmem:[%s6 + $0x18] sm:$0xff]
    %653 = vset.pattern.permute.xlu0 0
    %654 = vperm.xlu0 %653, %v648
    %v655 = vpop.permute.xlu0 %654
    %658 = vset.pattern.permute.xlu0 0
    %659 = vperm.xlu0 %658, %v649
    %v660 = vpop.permute.xlu0 %659
    %663 = vset.pattern.permute.xlu0 0
    %664 = vperm.xlu0 %663, %v650
    %v665 = vpop.permute.xlu0 %664
    %668 = vset.pattern.permute.xlu0 0
    %669 = vperm.xlu0 %668, %v651
    %v670 = vpop.permute.xlu0 %669
    %v672 = vadd.f32 %v644, %v655
    %v673 = vadd.f32 %v645, %v660
    %v674 = vadd.f32 %v646, %v665
    %v675 = vadd.f32 %v647, %v670
    %676 = vst [vmem:[#allocation2] sm:$0xff] %v672
    %677 = vst [vmem:[#allocation2 + $0x8] sm:$0xff] %v673
    %678 = vst [vmem:[#allocation2 + $0x10] sm:$0xff] %v674
    %679 = vst [vmem:[#allocation2 + $0x18] sm:$0xff] %v675
    // Predicated region
    $region30: #{tpu_custom_call.1} parent=1 // pred_check
      _
    $region31: #{tpu_custom_call.1} parent=1 // pred_check_branch
      %681 = sbr.rel (0) target = $region33
    $region32: #{tpu_custom_call.1} parent=1 // pred_region
      %s683 = ssub.s32 512, 512
      %684 = vsyncadd [#allocation3], %s683
      %s685 = sshll.u32 [#allocation2], 4
      %s686 = int_to_ptr.vmem [resolvable:$true] %s685
      %691 = dma.vmem_to_hbm [thread:$0]  %s686, 512, %s7, [#allocation3], 128, 128, 8
    $region33: #{tpu_custom_call.1} parent=1 // pred_fallthru
      _
    // Predicated region
    $region34: #{tpu_custom_call.1} parent=1 // pred_check
      _
    $region35: #{tpu_custom_call.1} parent=1 // pred_check_branch
      %693 = sbr.rel (0) target = $region37
    $region36: #{tpu_custom_call.1} parent=1 // pred_region
      %694 = dma.done [#allocation3], 512
    $region37: #{tpu_custom_call.1} parent=1 // pred_fallthru
      _
    %695 = vsyncpa [#allocation3], 1

</llo_original>
